<compile_context>
chip_gen: v5e
topology: v5e:2x2
jax: 0.10.0
libtpu: 0.0.40
codegen_flags: <defaults>
</compile_context>

<pallas_src>
import jax
import jax.numpy as jnp
from jax import lax
from jax.experimental import pallas as pl
from jax.experimental.pallas import tpu as pltpu

BN_EPS = 1e-5
LANE = 128


def _batchnorm_train(h, gamma, beta):
    # training-mode BatchNorm1d, single-pass statistics:
    #   mean = E[h], var = E[h^2] - E[h]^2  (biased variance, as PyTorch uses
    #   for normalization in training mode)
    m = jnp.mean(h, axis=0, keepdims=True)
    m2 = jnp.mean(h * h, axis=0, keepdims=True)
    v = m2 - m * m
    return (h - m) * lax.rsqrt(v + BN_EPS) * gamma + beta


def projector_kernel(x_ref, w1_ref, w2_ref, wh_ref, vec_ref, bh_ref, eps_ref,
                     out_ref):
    # ---- interpreter: Linear -> BN -> ReLU -> Linear -> BN -> ReLU ----
    # (b1/b2 omitted: exactly cancelled by the batch-mean subtraction in
    #  training-mode BatchNorm)
    vecs = vec_ref[...]                    # (4, hidden) f32: g1, be1, g2, be2
    g1, be1 = vecs[0:1, :], vecs[1:2, :]
    g2, be2 = vecs[2:3, :], vecs[3:4, :]

    x = x_ref[...].astype(jnp.bfloat16)
    h = jnp.dot(x, w1_ref[...], preferred_element_type=jnp.float32)
    h = _batchnorm_train(h, g1, be1)
    h = jnp.maximum(h, 0.0)

    h = jnp.dot(h.astype(jnp.bfloat16), w2_ref[...],
                preferred_element_type=jnp.float32)
    h = _batchnorm_train(h, g2, be2)
    h = jnp.maximum(h, 0.0)

    # ---- fused heads: one matmul producing [mu | logVar] ----
    heads = jnp.dot(h.astype(jnp.bfloat16), wh_ref[...],
                    preferred_element_type=jnp.float32) + bh_ref[...]
    out_dim = eps_ref.shape[1]
    mu = heads[:, :out_dim]
    lv = heads[:, out_dim:]

    # ---- reparameterize: rp = eps * exp(0.5 * logVar) + mu ----
    rp = eps_ref[...] * jnp.exp(0.5 * lv) + mu

    # single lane-dense output slab: [rp | mu | logVar | zero padding to 128k]
    slab = jnp.concatenate([rp, mu, lv], axis=1)       # (B, 3*out)
    pad = out_ref.shape[1] - slab.shape[1]
    if pad > 0:
        slab = jnp.concatenate(
            [slab, jnp.zeros((slab.shape[0], pad), slab.dtype)], axis=1)
    out_ref[...] = slab


def projector_forward(x, params, eps_noise):
    B = x.shape[0]
    out_dim = eps_noise.shape[1]
    slab_w = 3 * out_dim
    padded_w = ((slab_w + LANE - 1) // LANE) * LANE     # unmasked lane-dense store

    inputs = (
        x,                  # (B, in)           f32
        params["w1"],       # (in, hidden)      bf16
        params["w2"],       # (hidden, hidden)  bf16
        params["w_head"],   # (hidden, 2*out)   bf16   = [Wmu | Wvar]
        params["bn_vecs"],  # (4, hidden)       f32    = [g1; be1; g2; be2]
        params["b_head"],   # (1, 2*out)        f32    = [bmu | bvar]
        eps_noise,          # (B, out)          f32
    )

    vmem_spec = pl.BlockSpec(memory_space=pltpu.MemorySpace.VMEM)
    out_slab = pl.pallas_call(
        projector_kernel,
        out_shape=jax.ShapeDtypeStruct((B, padded_w), jnp.float32),
        in_specs=[vmem_spec] * len(inputs),
        out_specs=vmem_spec,
    )(*inputs)

    rp = out_slab[:, :out_dim]
    mu = out_slab[:, out_dim:2 * out_dim]
    lv = out_slab[:, 2 * out_dim:slab_w]
    return rp, mu, lv


def projector_reference(x, params, eps_noise):
    """Pure-JAX reference implementing the same math as the kernel."""
    vecs = params["bn_vecs"]
    g1, be1, g2, be2 = vecs[0:1], vecs[1:2], vecs[2:3], vecs[3:4]

    h = jnp.dot(x.astype(jnp.bfloat16), params["w1"],
                preferred_element_type=jnp.float32)
    h = _batchnorm_train(h, g1, be1)
    h = jnp.maximum(h, 0.0)

    h = jnp.dot(h.astype(jnp.bfloat16), params["w2"],
                preferred_element_type=jnp.float32)
    h = _batchnorm_train(h, g2, be2)
    h = jnp.maximum(h, 0.0)

    heads = jnp.dot(h.astype(jnp.bfloat16), params["w_head"],
                    preferred_element_type=jnp.float32) + params["b_head"]
    out_dim = eps_noise.shape[1]
    mu = heads[:, :out_dim]
    lv = heads[:, out_dim:]
    rp = eps_noise * jnp.exp(0.5 * lv) + mu
    return rp, mu, lv


def init_params(key, input_dim, hidden_dim, output_dim):
    ks = jax.random.split(key, 4)

    def lin(k, fan_in, fan_out):
        bound = 1.0 / jnp.sqrt(fan_in)
        kw, kb = jax.random.split(k)
        w = jax.random.uniform(kw, (fan_in, fan_out), jnp.float32, -bound, bound)
        b = jax.random.uniform(kb, (1, fan_out), jnp.float32, -bound, bound)
        return w, b

    # b1 / b2 exist in the PyTorch module but are exactly cancelled by
    # training-mode BatchNorm, so they are not materialized here.
    w1, _ = lin(ks[0], input_dim, hidden_dim)
    w2, _ = lin(ks[1], hidden_dim, hidden_dim)
    wmu, bmu = lin(ks[2], hidden_dim, output_dim)
    wv, bv = lin(ks[3], hidden_dim, output_dim)

    params = dict(
        w1=w1.astype(jnp.bfloat16),
        w2=w2.astype(jnp.bfloat16),
        w_head=jnp.concatenate([wmu, wv], axis=1).astype(jnp.bfloat16),
        b_head=jnp.concatenate([bmu, bv], axis=1),
        bn_vecs=jnp.concatenate(
            [jnp.ones((1, hidden_dim), jnp.float32),    # gamma1
             jnp.zeros((1, hidden_dim), jnp.float32),   # beta1
             jnp.ones((1, hidden_dim), jnp.float32),    # gamma2
             jnp.zeros((1, hidden_dim), jnp.float32)],  # beta2
            axis=0),
    )
    return params


if __name__ == "__main__":
    B, INPUT_DIM, HIDDEN_DIM, OUTPUT_DIM = 8, 32, 64, 16

    key = jax.random.PRNGKey(0)
    k_x, k_p, k_eps = jax.random.split(key, 3)

    x = jax.random.normal(k_x, (B, INPUT_DIM), jnp.float32)
    params = init_params(k_p, INPUT_DIM, HIDDEN_DIM, OUTPUT_DIM)
    # torch.randn_like(std) -> standard normal noise, generated deterministically
    eps_noise = jax.random.normal(k_eps, (B, OUTPUT_DIM), jnp.float32)

    rp, mu, logVar = projector_forward(x, params, eps_noise)
    jax.block_until_ready((rp, mu, logVar))

    assert rp.shape == (B, OUTPUT_DIM)
    assert mu.shape == (B, OUTPUT_DIM)
    assert logVar.shape == (B, OUTPUT_DIM)

    # reparameterization identity must hold on the kernel outputs
    assert jnp.allclose(rp, eps_noise * jnp.exp(0.5 * logVar) + mu,
                        atol=1e-5, rtol=1e-5)

    # end-to-end match against the pure-JAX reference (same math path)
    rp_r, mu_r, lv_r = projector_reference(x, params, eps_noise)
    assert jnp.allclose(mu, mu_r, atol=1e-2, rtol=1e-2)
    assert jnp.allclose(logVar, lv_r, atol=1e-2, rtol=1e-2)
    assert jnp.allclose(rp, rp_r, atol=1e-2, rtol=1e-2)

    print("KERNEL_OK")
</pallas_src>

<mosaic_0001>
module attributes {stable_mosaic.version = 11 : i64} {
  func.func @projector_kernel(%arg0: memref<8x32xf32, #tpu.memory_space<vmem>>, %arg1: memref<32x64xbf16, #tpu.memory_space<vmem>>, %arg2: memref<64x64xbf16, #tpu.memory_space<vmem>>, %arg3: memref<64x32xbf16, #tpu.memory_space<vmem>>, %arg4: memref<4x64xf32, #tpu.memory_space<vmem>>, %arg5: memref<1x32xf32, #tpu.memory_space<vmem>>, %arg6: memref<8x16xf32, #tpu.memory_space<vmem>>, %arg7: memref<8x128xf32, #tpu.memory_space<vmem>>) attributes {dimension_semantics = [], scalar_prefetch = 0 : i64, scratch_operands = 0 : i64, tpu.core_type = #tpu.core_type<tc>} {
    %c0 = arith.constant 0 : index
    %c0_0 = arith.constant 0 : index
    %0 = vector.load %arg4[%c0, %c0_0] : memref<4x64xf32, #tpu.memory_space<vmem>>, vector<4x64xf32>
    %1 = vector.extract_strided_slice %0 {offsets = [0, 0], sizes = [1, 64], strides = [1, 1]} : vector<4x64xf32> to vector<1x64xf32>
    %2 = vector.extract_strided_slice %0 {offsets = [1, 0], sizes = [1, 64], strides = [1, 1]} : vector<4x64xf32> to vector<1x64xf32>
    %3 = vector.extract_strided_slice %0 {offsets = [2, 0], sizes = [1, 64], strides = [1, 1]} : vector<4x64xf32> to vector<1x64xf32>
    %4 = vector.extract_strided_slice %0 {offsets = [3, 0], sizes = [1, 64], strides = [1, 1]} : vector<4x64xf32> to vector<1x64xf32>
    %c0_1 = arith.constant 0 : index
    %c0_2 = arith.constant 0 : index
    %5 = vector.load %arg0[%c0_1, %c0_2] : memref<8x32xf32, #tpu.memory_space<vmem>>, vector<8x32xf32>
    %6 = arith.truncf %5 : vector<8x32xf32> to vector<8x32xbf16>
    %c0_3 = arith.constant 0 : index
    %c0_4 = arith.constant 0 : index
    %7 = vector.load %arg1[%c0_3, %c0_4] : memref<32x64xbf16, #tpu.memory_space<vmem>>, vector<32x64xbf16>
    %cst = arith.constant dense<0.000000e+00> : vector<8x64xf32>
    %8 = tpu.matmul %6, %7, %cst {dimension_numbers = #tpu.dot_dimension_numbers<[1], [0], [0], [1], [0, 0, 1, 1], [], []>} : vector<8x32xbf16>, vector<32x64xbf16>, vector<8x64xf32> -> vector<8x64xf32>
    %cst_5 = arith.constant dense<0.000000e+00> : vector<64xf32>
    %9 = vector.multi_reduction <add>, %8, %cst_5 [0] : vector<8x64xf32> to vector<64xf32>
    %10 = vector.shape_cast %9 : vector<64xf32> to vector<1x64xf32>
    %cst_6 = arith.constant 8.000000e+00 : f32
    %11 = vector.broadcast %cst_6 : f32 to vector<1x64xf32>
    %12 = arith.divf %10, %11 : vector<1x64xf32>
    %13 = arith.mulf %8, %8 : vector<8x64xf32>
    %cst_7 = arith.constant dense<0.000000e+00> : vector<64xf32>
    %14 = vector.multi_reduction <add>, %13, %cst_7 [0] : vector<8x64xf32> to vector<64xf32>
    %15 = vector.shape_cast %14 : vector<64xf32> to vector<1x64xf32>
    %cst_8 = arith.constant 8.000000e+00 : f32
    %16 = vector.broadcast %cst_8 : f32 to vector<1x64xf32>
    %17 = arith.divf %15, %16 : vector<1x64xf32>
    %18 = arith.mulf %12, %12 : vector<1x64xf32>
    %19 = arith.subf %17, %18 : vector<1x64xf32>
    %20 = vector.broadcast %12 : vector<1x64xf32> to vector<8x64xf32>
    %21 = arith.subf %8, %20 : vector<8x64xf32>
    %cst_9 = arith.constant 9.99999974E-6 : f32
    %22 = vector.broadcast %cst_9 : f32 to vector<1x64xf32>
    %23 = arith.addf %19, %22 : vector<1x64xf32>
    %24 = math.rsqrt %23 : vector<1x64xf32>
    %25 = vector.broadcast %24 : vector<1x64xf32> to vector<8x64xf32>
    %26 = arith.mulf %21, %25 : vector<8x64xf32>
    %27 = vector.broadcast %1 : vector<1x64xf32> to vector<8x64xf32>
    %28 = arith.mulf %26, %27 : vector<8x64xf32>
    %29 = vector.broadcast %2 : vector<1x64xf32> to vector<8x64xf32>
    %30 = arith.addf %28, %29 : vector<8x64xf32>
    %cst_10 = arith.constant 0.000000e+00 : f32
    %31 = vector.broadcast %cst_10 : f32 to vector<8x64xf32>
    %32 = arith.maximumf %30, %31 : vector<8x64xf32>
    %33 = arith.truncf %32 : vector<8x64xf32> to vector<8x64xbf16>
    %c0_11 = arith.constant 0 : index
    %c0_12 = arith.constant 0 : index
    %34 = vector.load %arg2[%c0_11, %c0_12] : memref<64x64xbf16, #tpu.memory_space<vmem>>, vector<64x64xbf16>
    %cst_13 = arith.constant dense<0.000000e+00> : vector<8x64xf32>
    %35 = tpu.matmul %33, %34, %cst_13 {dimension_numbers = #tpu.dot_dimension_numbers<[1], [0], [0], [1], [0, 0, 1, 1], [], []>} : vector<8x64xbf16>, vector<64x64xbf16>, vector<8x64xf32> -> vector<8x64xf32>
    %cst_14 = arith.constant dense<0.000000e+00> : vector<64xf32>
    %36 = vector.multi_reduction <add>, %35, %cst_14 [0] : vector<8x64xf32> to vector<64xf32>
    %37 = vector.shape_cast %36 : vector<64xf32> to vector<1x64xf32>
    %cst_15 = arith.constant 8.000000e+00 : f32
    %38 = vector.broadcast %cst_15 : f32 to vector<1x64xf32>
    %39 = arith.divf %37, %38 : vector<1x64xf32>
    %40 = arith.mulf %35, %35 : vector<8x64xf32>
    %cst_16 = arith.constant dense<0.000000e+00> : vector<64xf32>
    %41 = vector.multi_reduction <add>, %40, %cst_16 [0] : vector<8x64xf32> to vector<64xf32>
    %42 = vector.shape_cast %41 : vector<64xf32> to vector<1x64xf32>
    %cst_17 = arith.constant 8.000000e+00 : f32
    %43 = vector.broadcast %cst_17 : f32 to vector<1x64xf32>
    %44 = arith.divf %42, %43 : vector<1x64xf32>
    %45 = arith.mulf %39, %39 : vector<1x64xf32>
    %46 = arith.subf %44, %45 : vector<1x64xf32>
    %47 = vector.broadcast %39 : vector<1x64xf32> to vector<8x64xf32>
    %48 = arith.subf %35, %47 : vector<8x64xf32>
    %cst_18 = arith.constant 9.99999974E-6 : f32
    %49 = vector.broadcast %cst_18 : f32 to vector<1x64xf32>
    %50 = arith.addf %46, %49 : vector<1x64xf32>
    %51 = math.rsqrt %50 : vector<1x64xf32>
    %52 = vector.broadcast %51 : vector<1x64xf32> to vector<8x64xf32>
    %53 = arith.mulf %48, %52 : vector<8x64xf32>
    %54 = vector.broadcast %3 : vector<1x64xf32> to vector<8x64xf32>
    %55 = arith.mulf %53, %54 : vector<8x64xf32>
    %56 = vector.broadcast %4 : vector<1x64xf32> to vector<8x64xf32>
    %57 = arith.addf %55, %56 : vector<8x64xf32>
    %cst_19 = arith.constant 0.000000e+00 : f32
    %58 = vector.broadcast %cst_19 : f32 to vector<8x64xf32>
    %59 = arith.maximumf %57, %58 : vector<8x64xf32>
    %60 = arith.truncf %59 : vector<8x64xf32> to vector<8x64xbf16>
    %c0_20 = arith.constant 0 : index
    %c0_21 = arith.constant 0 : index
    %61 = vector.load %arg3[%c0_20, %c0_21] : memref<64x32xbf16, #tpu.memory_space<vmem>>, vector<64x32xbf16>
    %cst_22 = arith.constant dense<0.000000e+00> : vector<8x32xf32>
    %62 = tpu.matmul %60, %61, %cst_22 {dimension_numbers = #tpu.dot_dimension_numbers<[1], [0], [0], [1], [0, 0, 1, 1], [], []>} : vector<8x64xbf16>, vector<64x32xbf16>, vector<8x32xf32> -> vector<8x32xf32>
    %c0_23 = arith.constant 0 : index
    %c0_24 = arith.constant 0 : index
    %63 = vector.load %arg5[%c0_23, %c0_24] : memref<1x32xf32, #tpu.memory_space<vmem>>, vector<1x32xf32>
    %64 = vector.broadcast %63 : vector<1x32xf32> to vector<8x32xf32>
    %65 = arith.addf %62, %64 : vector<8x32xf32>
    %66 = vector.extract_strided_slice %65 {offsets = [0, 0], sizes = [8, 16], strides = [1, 1]} : vector<8x32xf32> to vector<8x16xf32>
    %67 = vector.extract_strided_slice %65 {offsets = [0, 16], sizes = [8, 16], strides = [1, 1]} : vector<8x32xf32> to vector<8x16xf32>
    %c0_25 = arith.constant 0 : index
    %c0_26 = arith.constant 0 : index
    %68 = vector.load %arg6[%c0_25, %c0_26] : memref<8x16xf32, #tpu.memory_space<vmem>>, vector<8x16xf32>
    %cst_27 = arith.constant 5.000000e-01 : f32
    %69 = vector.broadcast %cst_27 : f32 to vector<8x16xf32>
    %70 = arith.mulf %69, %67 : vector<8x16xf32>
    %71 = math.exp %70 : vector<8x16xf32>
    %72 = arith.mulf %68, %71 : vector<8x16xf32>
    %73 = arith.addf %72, %66 : vector<8x16xf32>
    %74 = tpu.concatenate %73, %66, %67 in 1 : vector<8x16xf32>, vector<8x16xf32>, vector<8x16xf32> -> vector<8x48xf32>
    %cst_28 = arith.constant 0.000000e+00 : f32
    %75 = vector.broadcast %cst_28 : f32 to vector<8x80xf32>
    %76 = tpu.concatenate %74, %75 in 1 : vector<8x48xf32>, vector<8x80xf32> -> vector<8x128xf32>
    %c0_29 = arith.constant 0 : index
    %c0_30 = arith.constant 0 : index
    %77 = vector.load %arg7[%c0_29, %c0_30] : memref<8x128xf32, #tpu.memory_space<vmem>>, vector<8x128xf32>
    tpu.vector_store %arg7[%c0_29, %c0_30], %76 {strides = array<i32>} : memref<8x128xf32, #tpu.memory_space<vmem>>, vector<8x128xf32>,
    return
  }
}

</mosaic_0001>

<llo_original>
// kernel: tpu_custom_call.1
$region0: #{tpu_custom_call.1}
  #allocation0 [shape = 'u32[]', space=smem, size = 0x4, offset = 0x4, fixed_abs, tag = 'smem constant byte address 0x4 - core index']
  #allocation1 [shape = 'u32[72,128]{1,0:T(1,128)}', space=vmem, size = 0x9000, scoped, tag = 'internal scratch']
  %s0 = inlined_call_operand.hbm [shape: f32[8,32], index: 0, kind: input, shape index: {}]
  %s1 = inlined_call_operand.vmem [shape: bf16[32,64], index: 1, kind: input, shape index: {}]
  %s2 = inlined_call_operand.vmem [shape: bf16[64,64], index: 2, kind: input, shape index: {}]
  %s3 = inlined_call_operand.vmem [shape: bf16[64,32], index: 3, kind: input, shape index: {}]
  %s4 = inlined_call_operand.hbm [shape: f32[4,64], index: 4, kind: input, shape index: {}]
  %s5 = inlined_call_operand.vmem [shape: f32[1,32], index: 5, kind: input, shape index: {}]
  %s6 = inlined_call_operand.hbm [shape: f32[8,16], index: 6, kind: input, shape index: {}]
  %s7 = inlined_call_operand.hbm [shape: f32[8,128], index: 7, kind: output, shape index: {}]
  %s8 = sld [smem:[#allocation0]]
  $region50: #{tpu_custom_call.1} parent=0
    _
  %s10 = ssub.s32 1, %s8
  %s11 = scalar_select 0, %s10, %s8
  $region1: #{tpu_custom_call.1} parent=0
    #allocation2 [shape = 'u8[4096]{0}', space=vmem, size = 0x1000, scoped, tag = 'input window, operand 0, single buffered']
    #allocation3 [shape = 's32[1]{0}', space=sflag, size = 0x4, scoped, tag = 'scoped memory for tpu_custom_call.1']
    #allocation4 [shape = 's32[1]{0}', space=sflag, size = 0x4, scoped, tag = 'scoped memory for tpu_custom_call.1']
    #allocation5 [shape = 'u8[2048]{0}', space=vmem, size = 0x800, scoped, tag = 'input window, operand 4, single buffered']
    #allocation6 [shape = 's32[1]{0}', space=sflag, size = 0x4, scoped, tag = 'scoped memory for tpu_custom_call.1']
    #allocation7 [shape = 'u8[4096]{0}', space=vmem, size = 0x1000, scoped, tag = 'input window, operand 6, single buffered']
    #allocation8 [shape = 'u8[4096]{0}', space=vmem, size = 0x1000, scoped, tag = 'output window, operand 0, single buffered']
    %12 = vsyncpa [#allocation3], 0
    %13 = vsyncpa [#allocation6], 0
    %14 = vsyncpa [#allocation4], 0
    // Predicated region
    $region2: #{tpu_custom_call.1} parent=1 // pred_check
      _
    $region3: #{tpu_custom_call.1} parent=1 // pred_check_branch
      %16 = sbr.rel (0) target = $region5
    $region4: #{tpu_custom_call.1} parent=1 // pred_region
      %18 = vsyncadd [#allocation3], 0
      %s20 = sshll.u32 %s0, 4
      %s21 = int_to_ptr.hbm [resolvable:$true] %s20
      %s22 = sshll.u32 [#allocation2], 4
      %s23 = int_to_ptr.vmem [resolvable:$true] %s22
      %25 = dma.hbm_to_vmem [thread:$0]  %s21, 128, %s23, [#allocation3]
    $region5: #{tpu_custom_call.1} parent=1 // pred_fallthru
      _
    // Predicated region
    $region6: #{tpu_custom_call.1} parent=1 // pred_check
      _
    $region7: #{tpu_custom_call.1} parent=1 // pred_check_branch
      %27 = sbr.rel (0) target = $region9
    $region8: #{tpu_custom_call.1} parent=1 // pred_region
      _
    $region9: #{tpu_custom_call.1} parent=1 // pred_fallthru
      _
    // Predicated region
    $region10: #{tpu_custom_call.1} parent=1 // pred_check
      _
    $region11: #{tpu_custom_call.1} parent=1 // pred_check_branch
      %29 = sbr.rel (0) target = $region13
    $region12: #{tpu_custom_call.1} parent=1 // pred_region
      _
    $region13: #{tpu_custom_call.1} parent=1 // pred_fallthru
      _
    // Predicated region
    $region14: #{tpu_custom_call.1} parent=1 // pred_check
      _
    $region15: #{tpu_custom_call.1} parent=1 // pred_check_branch
      %31 = sbr.rel (0) target = $region17
    $region16: #{tpu_custom_call.1} parent=1 // pred_region
      _
    $region17: #{tpu_custom_call.1} parent=1 // pred_fallthru
      _
    // Predicated region
    $region18: #{tpu_custom_call.1} parent=1 // pred_check
      _
    $region19: #{tpu_custom_call.1} parent=1 // pred_check_branch
      %33 = sbr.rel (0) target = $region21
    $region20: #{tpu_custom_call.1} parent=1 // pred_region
      %35 = vsyncadd [#allocation6], 0
      %s37 = sshll.u32 %s4, 4
      %s38 = int_to_ptr.hbm [resolvable:$true] %s37
      %s39 = sshll.u32 [#allocation5], 4
      %s40 = int_to_ptr.vmem [resolvable:$true] %s39
      %42 = dma.hbm_to_vmem [thread:$0]  %s38, 64, %s40, [#allocation6]
    $region21: #{tpu_custom_call.1} parent=1 // pred_fallthru
      _
    // Predicated region
    $region22: #{tpu_custom_call.1} parent=1 // pred_check
      _
    $region23: #{tpu_custom_call.1} parent=1 // pred_check_branch
      %44 = sbr.rel (0) target = $region25
    $region24: #{tpu_custom_call.1} parent=1 // pred_region
      _
    $region25: #{tpu_custom_call.1} parent=1 // pred_fallthru
      _
    // Predicated region
    $region26: #{tpu_custom_call.1} parent=1 // pred_check
      _
    $region27: #{tpu_custom_call.1} parent=1 // pred_check_branch
      %46 = sbr.rel (0) target = $region29
    $region28: #{tpu_custom_call.1} parent=1 // pred_region
      %48 = vsyncadd [#allocation6], 0
      %s50 = sshll.u32 %s6, 4
      %s51 = int_to_ptr.hbm [resolvable:$true] %s50
      %s52 = sshll.u32 [#allocation7], 4
      %s53 = int_to_ptr.vmem [resolvable:$true] %s52
      %55 = dma.hbm_to_vmem [thread:$0]  %s51, 128, %s53, [#allocation6]
    $region29: #{tpu_custom_call.1} parent=1 // pred_fallthru
      _
    // Predicated region
    $region30: #{tpu_custom_call.1} parent=1 // pred_check
      _
    $region31: #{tpu_custom_call.1} parent=1 // pred_check_branch
      %57 = sbr.rel (0) target = $region33
    $region32: #{tpu_custom_call.1} parent=1 // pred_region
      %59 = dma.done [#allocation3], 128
    $region33: #{tpu_custom_call.1} parent=1 // pred_fallthru
      _
    // Predicated region
    $region34: #{tpu_custom_call.1} parent=1 // pred_check
      _
    $region35: #{tpu_custom_call.1} parent=1 // pred_check_branch
      %61 = sbr.rel (0) target = $region37
    $region36: #{tpu_custom_call.1} parent=1 // pred_region
      %63 = dma.done [#allocation6], 64
    $region37: #{tpu_custom_call.1} parent=1 // pred_fallthru
      _
    // Predicated region
    $region38: #{tpu_custom_call.1} parent=1 // pred_check
      _
    $region39: #{tpu_custom_call.1} parent=1 // pred_check_branch
      %65 = sbr.rel (0) target = $region41
    $region40: #{tpu_custom_call.1} parent=1 // pred_region
      %67 = dma.done [#allocation6], 128
    $region41: #{tpu_custom_call.1} parent=1 // pred_fallthru
      _
    %v69 = vld [vmem:[#allocation5] sm:$0xf]
    %v70 = vld [vmem:[#allocation2] sm:$0xff]
    %v71 = vpack.c.bf16 %v70, %v70
    %v72 = vld [vmem:[%s1] sm:$0xf]
    %v73 = vld [vmem:[%s1 + $0x4] sm:$0xf]
    %v74 = vld [vmem:[%s1 + $0x8] sm:$0xf]
    %v75 = vld [vmem:[%s1 + $0xc] sm:$0xf]
    %v80 = vunpack.c.l.b16 %v72
    %v81 = vunpack.c.l.b16 %v73
    %v82 = vunpack.c.l.b16 %v74
    %v83 = vunpack.c.l.b16 %v75
    %v84 = vpack.c.b16 %v81, %v80
    %v85 = vpack.c.b16 %v83, %v82
    %vm88 = vcmask 261120
    %v90 = vsel %vm88, %v71, 0
    %92 = vmatpush.bf16.msra.mxu0 0
    %93 = vmatpush.bf16.msra.mxu0 0
    %94 = vmatpush.bf16.msra.mxu0 0
    %95 = vmatpush.bf16.msra.mxu0 0
    %96 = vmatpush.bf16.msra.mxu0 0
    %97 = vmatpush.bf16.msra.mxu0 0
    %98 = vmatpush.bf16.msra.mxu0 %v85
    %99 = vmatpush.bf16.msra.mxu0 %v84
    %100 = vmatmul.bf16.gmra.mxu0 %v90
    %v101 = vpop.f32.mrf.mxu0
    %v102 = vadd.f32 0.0, %v101
    %v103 = vpop.f32.mrf.mxu0
    %104 = vdwg.mxu0
    %vm105 = vcmask 523264
    %v106 = vsel %vm105, %v102, 0.0
    %v107 = vrot.slane %v106, 4
    %v108 = vadd.f32 %v106, %v107
    %v109 = vrot.slane %v108, 2
    %v110 = vadd.f32 %v108, %v109
    %v111 = vrot.slane %v110, 1
    %v112 = vadd.f32 %v110, %v111
    %v113 = vrcp.pop 8.0
    %v114 = vmul.f32 8.0, %v113
    %v115 = vsub.f32 1.0, %v114
    %v116 = vmul.f32 %v113, %v115
    %v117 = vadd.f32 %v113, %v116
    %vm118 = vweird.f32 %v113
    %v119 = vsel %vm118, %v113, %v117
    %v120 = vmul.f32 %v112, %v119
    %v121 = vmul.f32 %v102, %v102
    %v122 = vsel %vm105, %v121, 0.0
    %v123 = vrot.slane %v122, 4
    %v124 = vadd.f32 %v122, %v123
    %v125 = vrot.slane %v124, 2
    %v126 = vadd.f32 %v124, %v125
    %v127 = vrot.slane %v126, 1
    %v128 = vadd.f32 %v126, %v127
    %v129 = vmul.f32 %v128, %v119
    %v130 = vmul.f32 %v120, %v120
    %v131 = vsub.f32 %v129, %v130
    %v132 = vsub.f32 %v102, %v120
    %v133 = vadd.f32 %v131, 1e-05
    %v134 = vrsqrt.pop %v133
    %v135 = vmul.f32 %v134, %v133
    %v136 = vmul.f32 %v135, %v134
    %v137 = vmul.f32 0.5, %v136
    %v138 = vsub.f32 1.5, %v137
    %v139 = vmul.f32 %v134, %v138
    %vm140 = vweird.f32 %v133
    %vm141 = vweird.f32 %v134
    %vm142 = vmor %vm140, %vm141
    %v143 = vsel %vm142, %v134, %v139
    %v144 = vmul.f32 %v132, %v143
    %v145 = vperm.slane %v69, 0
    %v146 = vmul.f32 %v144, %v145
    %v147 = vperm.slane %v69, 1
    %v148 = vadd.f32 %v146, %v147
    %v149 = vmax.f32 %v148, 0.0
    %v150 = vpack.c.bf16 %v149, %v149
    %v151 = vld [vmem:[%s2] sm:$0xf]
    %v152 = vld [vmem:[%s2 + $0x4] sm:$0xf]
    %v153 = vld [vmem:[%s2 + $0x8] sm:$0xf]
    %v154 = vld [vmem:[%s2 + $0xc] sm:$0xf]
    %v155 = vld [vmem:[%s2 + $0x10] sm:$0xf]
    %v156 = vld [vmem:[%s2 + $0x14] sm:$0xf]
    %v157 = vld [vmem:[%s2 + $0x18] sm:$0xf]
    %v158 = vld [vmem:[%s2 + $0x1c] sm:$0xf]
    %v167 = vunpack.c.l.b16 %v151
    %v168 = vunpack.c.l.b16 %v152
    %v169 = vunpack.c.l.b16 %v153
    %v170 = vunpack.c.l.b16 %v154
    %v171 = vunpack.c.l.b16 %v155
    %v172 = vunpack.c.l.b16 %v156
    %v173 = vunpack.c.l.b16 %v157
    %v174 = vunpack.c.l.b16 %v158
    %v175 = vpack.c.b16 %v168, %v167
    %v176 = vpack.c.b16 %v170, %v169
    %v177 = vpack.c.b16 %v172, %v171
    %v178 = vpack.c.b16 %v174, %v173
    %v184 = vsel %vm105, %v150, 0
    %186 = vmatpush.bf16.msra.mxu0 0
    %187 = vmatpush.bf16.msra.mxu0 0
    %188 = vmatpush.bf16.msra.mxu0 0
    %189 = vmatpush.bf16.msra.mxu0 0
    %190 = vmatpush.bf16.msra.mxu0 %v178
    %191 = vmatpush.bf16.msra.mxu0 %v177
    %192 = vmatpush.bf16.msra.mxu0 %v176
    %193 = vmatpush.bf16.msra.mxu0 %v175
    %194 = vmatmul.bf16.gmra.mxu0 %v184
    %v195 = vpop.f32.mrf.mxu0
    %v196 = vadd.f32 0.0, %v195
    %v197 = vpop.f32.mrf.mxu0
    %198 = vdwg.mxu0
    %v199 = vsel %vm105, %v196, 0.0
    %v200 = vrot.slane %v199, 4
    %v201 = vadd.f32 %v199, %v200
    %v202 = vrot.slane %v201, 2
    %v203 = vadd.f32 %v201, %v202
    %v204 = vrot.slane %v203, 1
    %v205 = vadd.f32 %v203, %v204
    %v206 = vmul.f32 %v205, %v119
    %v207 = vmul.f32 %v196, %v196
    %v208 = vsel %vm105, %v207, 0.0
    %v209 = vrot.slane %v208, 4
    %v210 = vadd.f32 %v208, %v209
    %v211 = vrot.slane %v210, 2
    %v212 = vadd.f32 %v210, %v211
    %v213 = vrot.slane %v212, 1
    %v214 = vadd.f32 %v212, %v213
    %v215 = vmul.f32 %v214, %v119
    %v216 = vmul.f32 %v206, %v206
    %v217 = vsub.f32 %v215, %v216
    %v218 = vsub.f32 %v196, %v206
    %v219 = vadd.f32 %v217, 1e-05
    %v220 = vrsqrt.pop %v219
    %v221 = vmul.f32 %v220, %v219
    %v222 = vmul.f32 %v221, %v220
    %v223 = vmul.f32 0.5, %v222
    %v224 = vsub.f32 1.5, %v223
    %v225 = vmul.f32 %v220, %v224
    %vm226 = vweird.f32 %v219
    %vm227 = vweird.f32 %v220
    %vm228 = vmor %vm226, %vm227
    %v229 = vsel %vm228, %v220, %v225
    %v230 = vmul.f32 %v218, %v229
    %v231 = vperm.slane %v69, 2
    %v232 = vmul.f32 %v230, %v231
    %v233 = vperm.slane %v69, 3
    %v234 = vadd.f32 %v232, %v233
    %v235 = vmax.f32 %v234, 0.0
    %v236 = vpack.c.bf16 %v235, %v235
    %v237 = vld [vmem:[%s3] sm:$0xf]
    %v238 = vld [vmem:[%s3 + $0x4] sm:$0xf]
    %v239 = vld [vmem:[%s3 + $0x8] sm:$0xf]
    %v240 = vld [vmem:[%s3 + $0xc] sm:$0xf]
    %v241 = vld [vmem:[%s3 + $0x10] sm:$0xf]
    %v242 = vld [vmem:[%s3 + $0x14] sm:$0xf]
    %v243 = vld [vmem:[%s3 + $0x18] sm:$0xf]
    %v244 = vld [vmem:[%s3 + $0x1c] sm:$0xf]
    %v245 = vld [vmem:[%s5] sm:$0x1]
    %v247 = vperm.slane %v245, 0
    %v257 = vunpack.c.l.b16 %v237
    %v258 = vunpack.c.l.b16 %v238
    %v259 = vunpack.c.l.b16 %v239
    %v260 = vunpack.c.l.b16 %v240
    %v261 = vunpack.c.l.b16 %v241
    %v262 = vunpack.c.l.b16 %v242
    %v263 = vunpack.c.l.b16 %v243
    %v264 = vunpack.c.l.b16 %v244
    %v265 = vpack.c.b16 %v258, %v257
    %v266 = vpack.c.b16 %v260, %v259
    %v267 = vpack.c.b16 %v262, %v261
    %v268 = vpack.c.b16 %v264, %v263
    %v274 = vsel %vm105, %v236, 0
    %276 = vmatpush.bf16.msra.mxu0 0
    %277 = vmatpush.bf16.msra.mxu0 0
    %278 = vmatpush.bf16.msra.mxu0 0
    %279 = vmatpush.bf16.msra.mxu0 0
    %280 = vmatpush.bf16.msra.mxu0 %v268
    %281 = vmatpush.bf16.msra.mxu0 %v267
    %282 = vmatpush.bf16.msra.mxu0 %v266
    %283 = vmatpush.bf16.msra.mxu0 %v265
    %284 = vmatmul.bf16.gmra.mxu0 %v274
    %v285 = vpop.f32.mrf.mxu0
    %v286 = vadd.f32 %v247, %v285
    %v287 = vpop.f32.mrf.mxu0
    %288 = vdwg.mxu0
    %v289 = vld [vmem:[#allocation7] sm:$0xff]
    %v290 = vmul.f32 %v286, 0.5
    %v291 = vmul.f32 %v290, 1.442695
    %v292 = vpow.pop %v291
    %294 = vrot.lane.b32.xlu0 %v292, 112
    %v295 = vpop.permute.xlu0 %294
    %v297 = vmul.f32 %v289, %v295
    %v298 = vadd.f32 %v297, %v286
    %300 = vrot.lane.b32.xlu0 %v286, 16
    %v301 = vpop.permute.xlu0 %300
    %vm303 = vcmask 130048
    %v304 = vsel %vm303, %v298, %v301
    %v305 = vsel %vm88, %v304, %v301
    %vm306 = vcmask 392192
    %v307 = vsel %vm306, %v305, 0.0
    %308 = vst [vmem:[#allocation8] sm:$0xff] %v307
    // Predicated region
    $region42: #{tpu_custom_call.1} parent=1 // pred_check
      _
    $region43: #{tpu_custom_call.1} parent=1 // pred_check_branch
      %310 = sbr.rel (0) target = $region45
    $region44: #{tpu_custom_call.1} parent=1 // pred_region
      %312 = vsyncadd [#allocation4], 0
      %s314 = sshll.u32 [#allocation8], 4
      %s315 = int_to_ptr.vmem [resolvable:$true] %s314
      %s316 = sshll.u32 %s7, 4
      %s317 = int_to_ptr.hbm [resolvable:$true] %s316
      %319 = dma.vmem_to_hbm [thread:$0]  %s315, 128, %s317, [#allocation4]
    $region45: #{tpu_custom_call.1} parent=1 // pred_fallthru
      _
    // Predicated region
    $region46: #{tpu_custom_call.1} parent=1 // pred_check
      _
    $region47: #{tpu_custom_call.1} parent=1 // pred_check_branch
      %321 = sbr.rel (0) target = $region49
    $region48: #{tpu_custom_call.1} parent=1 // pred_region
      %323 = dma.done [#allocation4], 128
    $region49: #{tpu_custom_call.1} parent=1 // pred_fallthru
      _
    %324 = vsyncpa [#allocation3], 1
    %325 = vsyncpa [#allocation6], 1
    %326 = vsyncpa [#allocation4], 1

</llo_original>
